<compile_context>
chip_gen: v7x
topology: tpu7x:2x2x1
jax: 0.10.0
libtpu: 0.0.40
codegen_flags: <defaults>
</compile_context>

<pallas_src>
import functools

import jax
import jax.numpy as jnp
from jax.experimental import pallas as pl
from jax.experimental.pallas import tpu as pltpu


def _round_up(x, m):
    return (x + m - 1) // m * m


def _pick_row_tile(Ho, Wo, target_rows=512):
    """Largest divisor d of Ho with (d*Wo) % 8 == 0 and d*Wo <= target_rows."""
    best = None
    for d in range(1, Ho + 1):
        if Ho % d == 0 and (d * Wo) % 8 == 0 and d * Wo <= target_rows:
            best = d
    if best is None:
        if (Ho * Wo) % 8 != 0:
            raise ValueError("Ho*Wo must be a multiple of 8 for this kernel")
        best = Ho
    return best


def _conv_bnstats_kernel(y_ref, w_ref, b_ref, o_ref, st_ref, *, TOH, Wo, C4, Cpad):
    """Fused im2col + conv matmul (+bias) + per-tile BN partial stats.

    y_ref : (1, Hy, Wy, C4)  space-to-depth padded image (resident over t)
    w_ref : (4, C4, Cpad)    reshaped conv weight (2x2 window positions)
    b_ref : (1, Cpad)        bias (zero-padded lanes)
    o_ref : (BM, Cpad)       conv output tile (BM = TOH*Wo rows)
    st_ref: (1, 2, Cpad)     [partial sum ; partial sum of squares]
    """
    BM = TOH * Wo
    t = pl.program_id(1)

    acc = jnp.zeros((BM, Cpad), jnp.float32)
    # 2x2 stride-1 conv over the space-to-depth image == original 4x4 stride-2 conv.
    for i, (da, db) in enumerate(((0, 0), (0, 1), (1, 0), (1, 1))):
        p = y_ref[0, pl.ds(t * TOH + da, TOH), pl.ds(db, Wo), :]   # (TOH, Wo, C4)
        p = p.reshape(BM, C4)
        acc = acc + jnp.dot(p, w_ref[i], preferred_element_type=jnp.float32)
    acc = acc + b_ref[...]

    o_ref[...] = acc

    s = jnp.sum(acc, axis=0, keepdims=True)           # (1, Cpad)
    ss = jnp.sum(acc * acc, axis=0, keepdims=True)    # (1, Cpad)
    st_ref[0, :, :] = jnp.concatenate([s, ss], axis=0)


def _bn_relu_kernel(y_ref, sc_ref, sh_ref, o_ref):
    # y * scale + shift == gamma * (y - mean) / sqrt(var + eps) + beta, then ReLU.
    o_ref[...] = jnp.maximum(y_ref[...] * sc_ref[...] + sh_ref[...], 0.0)


def down_forward(x, w, b, gamma, beta, eps=1e-5, compute_dtype=jnp.float32):
    """x: (N, Cin, H, W) f32, w: (Cout, Cin, 4, 4). Returns (N, Cout, H//2, W//2)."""
    N, Cin, H, W = x.shape
    Cout, Cin_w, KH, KW = w.shape
    assert (Cin_w, KH, KW) == (Cin, 4, 4)
    assert H % 2 == 0 and W % 2 == 0, "even spatial dims expected for k=4,s=2,pad=1"

    Ho, Wo = H // 2, W // 2
    Hy, Wy = Ho + 1, Wo + 1          # (H+2)//2, (W+2)//2
    C4 = 4 * Cin
    Cpad = max(128, _round_up(Cout, 128))   # lane-dense output channels

    # ---- glue: NCHW -> NHWC, reflection pad, space-to-depth (stride-2 phases) ----
    x_nhwc = jnp.transpose(x, (0, 2, 3, 1))
    xp = jnp.pad(x_nhwc, ((0, 0), (1, 1), (1, 1), (0, 0)), mode="reflect")
    # y[n, i, j, di*2*Cin + dj*Cin + c] = xp[n, 2i+di, 2j+dj, c]
    y = xp.reshape(N, Hy, 2, Wy, 2, Cin).transpose(0, 1, 3, 2, 4, 5)
    y = y.reshape(N, Hy, Wy, C4).astype(compute_dtype)

    # weight (Cout, Cin, 4, 4) -> (4 window positions, 4*Cin, Cpad), zero-padded lanes
    w6 = w.reshape(Cout, Cin, 2, 2, 2, 2)                 # (co, c, a, di, b, dj)
    wm = jnp.transpose(w6, (2, 4, 3, 5, 1, 0)).reshape(4, C4, Cout)
    wm = jnp.pad(wm, ((0, 0), (0, 0), (0, Cpad - Cout))).astype(compute_dtype)
    bm = jnp.pad(b.reshape(1, Cout).astype(jnp.float32), ((0, 0), (0, Cpad - Cout)))

    TOH = _pick_row_tile(Ho, Wo)      # output-row tile
    BM = TOH * Wo                     # rows of the (M, Cpad) slab per grid step
    num_t = Ho // TOH
    NB = N * num_t
    M = N * Ho * Wo

    conv_kernel = functools.partial(
        _conv_bnstats_kernel, TOH=TOH, Wo=Wo, C4=C4, Cpad=Cpad)

    itemsize = jnp.dtype(compute_dtype).itemsize
    conv_cost = pl.CostEstimate(
        flops=2 * M * (16 * Cin) * Cpad,
        transcendentals=0,
        bytes_accessed=y.size * itemsize + wm.size * itemsize + M * Cpad * 4)

    # ---- Pallas kernel 1: fused im2col + conv (+bias) + BN partial stats ----
    conv_out, stats = pl.pallas_call(
        conv_kernel,
        out_shape=(
            jax.ShapeDtypeStruct((M, Cpad), jnp.float32),
            jax.ShapeDtypeStruct((NB, 2, Cpad), jnp.float32),
        ),
        grid=(N, num_t),
        in_specs=[
            # whole space-to-depth image stays VMEM-resident across the t axis
            pl.BlockSpec((1, Hy, Wy, C4), lambda n, t: (n, 0, 0, 0)),
            pl.BlockSpec((4, C4, Cpad), lambda n, t: (0, 0, 0)),
            pl.BlockSpec((1, Cpad), lambda n, t: (0, 0)),
        ],
        out_specs=(
            pl.BlockSpec((BM, Cpad), lambda n, t: (n * num_t + t, 0)),
            pl.BlockSpec((1, 2, Cpad), lambda n, t: (n * num_t + t, 0, 0)),
        ),
        compiler_params=pltpu.CompilerParams(
            dimension_semantics=("parallel", "parallel"),
            vmem_limit_bytes=32 * 1024 * 1024,
        ),
        cost_estimate=conv_cost,
    )(y, wm, bm)

    # ---- finalize BatchNorm batch statistics (tiny reduce, biased variance) ----
    tot = jnp.sum(stats, axis=0)                    # (2, Cpad)
    mean = tot[0] / M
    var = jnp.maximum(tot[1] / M - mean * mean, 0.0)
    gamma_p = jnp.pad(gamma.astype(jnp.float32), (0, Cpad - Cout))
    beta_p = jnp.pad(beta.astype(jnp.float32), (0, Cpad - Cout))
    scale = (gamma_p / jnp.sqrt(var + eps)).reshape(1, Cpad)
    shift = (beta_p - mean * scale[0]).reshape(1, Cpad)
    # TODO(synk): running_mean/running_var buffer updates (training side effect)
    # are not materialized; forward output matches PyTorch training-mode BN.

    # ---- Pallas kernel 2: tiled fused BN affine + ReLU ----
    bn_cost = pl.CostEstimate(
        flops=3 * M * Cpad, transcendentals=0, bytes_accessed=2 * M * Cpad * 4)
    yact = pl.pallas_call(
        _bn_relu_kernel,
        out_shape=jax.ShapeDtypeStruct((M, Cpad), jnp.float32),
        grid=(NB,),
        in_specs=[
            pl.BlockSpec((BM, Cpad), lambda i: (i, 0)),
            pl.BlockSpec((1, Cpad), lambda i: (0, 0)),
            pl.BlockSpec((1, Cpad), lambda i: (0, 0)),
        ],
        out_specs=pl.BlockSpec((BM, Cpad), lambda i: (i, 0)),
        compiler_params=pltpu.CompilerParams(
            dimension_semantics=("parallel",),
            vmem_limit_bytes=32 * 1024 * 1024,
        ),
        cost_estimate=bn_cost,
    )(conv_out, scale, shift)

    # (M, Cpad) -> slice channels -> NHWC -> NCHW
    out = yact[:, :Cout].reshape(N, Ho, Wo, Cout)
    return jnp.transpose(out, (0, 3, 1, 2)).astype(x.dtype)


if __name__ == "__main__":
    in_channels, out_channels = 4, 8
    N, H, W = 2, 16, 16

    key = jax.random.PRNGKey(0)
    kx, kw, kb = jax.random.split(key, 3)

    x = jax.random.normal(kx, (N, in_channels, H, W), dtype=jnp.float32)
    w = 0.1 * jax.random.normal(kw, (out_channels, in_channels, 4, 4), dtype=jnp.float32)
    b = 0.1 * jax.random.normal(kb, (out_channels,), dtype=jnp.float32)
    gamma = jnp.ones((out_channels,), dtype=jnp.float32)   # BN weight default
    beta = jnp.zeros((out_channels,), dtype=jnp.float32)   # BN bias default

    out = jax.jit(down_forward)(x, w, b, gamma, beta)
    jax.block_until_ready(out)
    assert out.shape == (N, out_channels, H // 2, W // 2), out.shape
    print("KERNEL_OK")
</pallas_src>

<mosaic_0001>
module attributes {stable_mosaic.version = 11 : i64} {
  func.func @_conv_bnstats_kernel(%arg0: i32, %arg1: i32, %arg2: memref<1x9x9x16xf32, #tpu.memory_space<vmem>>, %arg3: memref<4x16x128xf32, #tpu.memory_space<vmem>>, %arg4: memref<1x128xf32, #tpu.memory_space<vmem>>, %arg5: memref<64x128xf32, #tpu.memory_space<vmem>>, %arg6: memref<1x2x128xf32, #tpu.memory_space<vmem>>) attributes {dimension_semantics = [#tpu.dimension_semantics<parallel>, #tpu.dimension_semantics<parallel>], iteration_bounds = array<i64: 2, 1>, scalar_prefetch = 0 : i64, scratch_operands = 0 : i64, tpu.core_type = #tpu.core_type<tc>, window_params = [{transform_indices = @transform_0, window_bounds = array<i64: 1, 9, 9, 16>}, {pipeline_mode = #tpu.pipeline_mode<synchronous>, transform_indices = @transform_1, window_bounds = array<i64: 4, 16, 128>}, {pipeline_mode = #tpu.pipeline_mode<synchronous>, transform_indices = @transform_2, window_bounds = array<i64: 1, 128>}, {transform_indices = @transform_3, window_bounds = array<i64: 64, 128>}, {transform_indices = @transform_4, window_bounds = array<i64: 1, 2, 128>}]} {
    %cst = arith.constant 0.000000e+00 : f32
    %0 = vector.broadcast %cst : f32 to vector<64x128xf32>
    %c8_i32 = arith.constant 8 : i32
    %1 = arith.muli %arg1, %c8_i32 : i32
    %c0_i32 = arith.constant 0 : i32
    %2 = arith.addi %1, %c0_i32 : i32
    %c0 = arith.constant 0 : index
    %3 = arith.index_cast %2 : i32 to index
    %c0_0 = arith.constant 0 : index
    %c0_1 = arith.constant 0 : index
    %4 = vector.load %arg2[%c0, %3, %c0_0, %c0_1] : memref<1x9x9x16xf32, #tpu.memory_space<vmem>>, vector<1x8x8x16xf32>
    %5 = vector.shape_cast %4 : vector<1x8x8x16xf32> to vector<8x8x16xf32>
    %6 = vector.shape_cast %5 : vector<8x8x16xf32> to vector<64x16xf32>
    %c0_2 = arith.constant 0 : index
    %c0_3 = arith.constant 0 : index
    %c0_4 = arith.constant 0 : index
    %7 = vector.load %arg3[%c0_2, %c0_3, %c0_4] : memref<4x16x128xf32, #tpu.memory_space<vmem>>, vector<1x16x128xf32>
    %8 = vector.shape_cast %7 : vector<1x16x128xf32> to vector<16x128xf32>
    %cst_5 = arith.constant dense<0.000000e+00> : vector<64x128xf32>
    %9 = tpu.matmul %6, %8, %cst_5 {dimension_numbers = #tpu.dot_dimension_numbers<[1], [0], [0], [1], [0, 0, 1, 1], [], []>} : vector<64x16xf32>, vector<16x128xf32>, vector<64x128xf32> -> vector<64x128xf32>
    %10 = arith.addf %0, %9 : vector<64x128xf32>
    %c8_i32_6 = arith.constant 8 : i32
    %11 = arith.muli %arg1, %c8_i32_6 : i32
    %c0_i32_7 = arith.constant 0 : i32
    %12 = arith.addi %11, %c0_i32_7 : i32
    %c0_8 = arith.constant 0 : index
    %13 = arith.index_cast %12 : i32 to index
    %c1 = arith.constant 1 : index
    %c0_9 = arith.constant 0 : index
    %14 = vector.load %arg2[%c0_8, %13, %c1, %c0_9] : memref<1x9x9x16xf32, #tpu.memory_space<vmem>>, vector<1x8x8x16xf32>
    %15 = vector.shape_cast %14 : vector<1x8x8x16xf32> to vector<8x8x16xf32>
    %16 = vector.shape_cast %15 : vector<8x8x16xf32> to vector<64x16xf32>
    %c1_10 = arith.constant 1 : index
    %c0_11 = arith.constant 0 : index
    %c0_12 = arith.constant 0 : index
    %17 = vector.load %arg3[%c1_10, %c0_11, %c0_12] : memref<4x16x128xf32, #tpu.memory_space<vmem>>, vector<1x16x128xf32>
    %18 = vector.shape_cast %17 : vector<1x16x128xf32> to vector<16x128xf32>
    %cst_13 = arith.constant dense<0.000000e+00> : vector<64x128xf32>
    %19 = tpu.matmul %16, %18, %cst_13 {dimension_numbers = #tpu.dot_dimension_numbers<[1], [0], [0], [1], [0, 0, 1, 1], [], []>} : vector<64x16xf32>, vector<16x128xf32>, vector<64x128xf32> -> vector<64x128xf32>
    %20 = arith.addf %10, %19 : vector<64x128xf32>
    %c8_i32_14 = arith.constant 8 : i32
    %21 = arith.muli %arg1, %c8_i32_14 : i32
    %c1_i32 = arith.constant 1 : i32
    %22 = arith.addi %21, %c1_i32 : i32
    %c0_15 = arith.constant 0 : index
    %23 = arith.index_cast %22 : i32 to index
    %c0_16 = arith.constant 0 : index
    %c0_17 = arith.constant 0 : index
    %24 = vector.load %arg2[%c0_15, %23, %c0_16, %c0_17] : memref<1x9x9x16xf32, #tpu.memory_space<vmem>>, vector<1x8x8x16xf32>
    %25 = vector.shape_cast %24 : vector<1x8x8x16xf32> to vector<8x8x16xf32>
    %26 = vector.shape_cast %25 : vector<8x8x16xf32> to vector<64x16xf32>
    %c2 = arith.constant 2 : index
    %c0_18 = arith.constant 0 : index
    %c0_19 = arith.constant 0 : index
    %27 = vector.load %arg3[%c2, %c0_18, %c0_19] : memref<4x16x128xf32, #tpu.memory_space<vmem>>, vector<1x16x128xf32>
    %28 = vector.shape_cast %27 : vector<1x16x128xf32> to vector<16x128xf32>
    %cst_20 = arith.constant dense<0.000000e+00> : vector<64x128xf32>
    %29 = tpu.matmul %26, %28, %cst_20 {dimension_numbers = #tpu.dot_dimension_numbers<[1], [0], [0], [1], [0, 0, 1, 1], [], []>} : vector<64x16xf32>, vector<16x128xf32>, vector<64x128xf32> -> vector<64x128xf32>
    %30 = arith.addf %20, %29 : vector<64x128xf32>
    %c8_i32_21 = arith.constant 8 : i32
    %31 = arith.muli %arg1, %c8_i32_21 : i32
    %c1_i32_22 = arith.constant 1 : i32
    %32 = arith.addi %31, %c1_i32_22 : i32
    %c0_23 = arith.constant 0 : index
    %33 = arith.index_cast %32 : i32 to index
    %c1_24 = arith.constant 1 : index
    %c0_25 = arith.constant 0 : index
    %34 = vector.load %arg2[%c0_23, %33, %c1_24, %c0_25] : memref<1x9x9x16xf32, #tpu.memory_space<vmem>>, vector<1x8x8x16xf32>
    %35 = vector.shape_cast %34 : vector<1x8x8x16xf32> to vector<8x8x16xf32>
    %36 = vector.shape_cast %35 : vector<8x8x16xf32> to vector<64x16xf32>
    %c3 = arith.constant 3 : index
    %c0_26 = arith.constant 0 : index
    %c0_27 = arith.constant 0 : index
    %37 = vector.load %arg3[%c3, %c0_26, %c0_27] : memref<4x16x128xf32, #tpu.memory_space<vmem>>, vector<1x16x128xf32>
    %38 = vector.shape_cast %37 : vector<1x16x128xf32> to vector<16x128xf32>
    %cst_28 = arith.constant dense<0.000000e+00> : vector<64x128xf32>
    %39 = tpu.matmul %36, %38, %cst_28 {dimension_numbers = #tpu.dot_dimension_numbers<[1], [0], [0], [1], [0, 0, 1, 1], [], []>} : vector<64x16xf32>, vector<16x128xf32>, vector<64x128xf32> -> vector<64x128xf32>
    %40 = arith.addf %30, %39 : vector<64x128xf32>
    %c0_29 = arith.constant 0 : index
    %c0_30 = arith.constant 0 : index
    %41 = vector.load %arg4[%c0_29, %c0_30] : memref<1x128xf32, #tpu.memory_space<vmem>>, vector<1x128xf32>
    %42 = vector.broadcast %41 : vector<1x128xf32> to vector<64x128xf32>
    %43 = arith.addf %40, %42 : vector<64x128xf32>
    %c0_31 = arith.constant 0 : index
    %c0_32 = arith.constant 0 : index
    %44 = vector.load %arg5[%c0_31, %c0_32] : memref<64x128xf32, #tpu.memory_space<vmem>>, vector<64x128xf32>
    tpu.vector_store %arg5[%c0_31, %c0_32], %43 {strides = array<i32>} : memref<64x128xf32, #tpu.memory_space<vmem>>, vector<64x128xf32>,
    %cst_33 = arith.constant dense<0.000000e+00> : vector<128xf32>
    %45 = vector.multi_reduction <add>, %43, %cst_33 [0] : vector<64x128xf32> to vector<128xf32>
    %46 = vector.shape_cast %45 : vector<128xf32> to vector<1x128xf32>
    %47 = arith.mulf %43, %43 : vector<64x128xf32>
    %cst_34 = arith.constant dense<0.000000e+00> : vector<128xf32>
    %48 = vector.multi_reduction <add>, %47, %cst_34 [0] : vector<64x128xf32> to vector<128xf32>
    %49 = vector.shape_cast %48 : vector<128xf32> to vector<1x128xf32>
    %50 = tpu.concatenate %46, %49 in 0 : vector<1x128xf32>, vector<1x128xf32> -> vector<2x128xf32>
    %c0_35 = arith.constant 0 : index
    %c0_36 = arith.constant 0 : index
    %c0_37 = arith.constant 0 : index
    %51 = vector.load %arg6[%c0_35, %c0_36, %c0_37] : memref<1x2x128xf32, #tpu.memory_space<vmem>>, vector<1x2x128xf32>
    %52 = vector.shape_cast %51 : vector<1x2x128xf32> to vector<2x128xf32>
    %53 = vector.shape_cast %50 : vector<2x128xf32> to vector<1x2x128xf32>
    tpu.vector_store %arg6[%c0_35, %c0_36, %c0_37], %53 {strides = array<i32>} : memref<1x2x128xf32, #tpu.memory_space<vmem>>, vector<1x2x128xf32>,
    return
  }
  func.func @transform_0(%arg0: i32, %arg1: i32) -> (i32, i32, i32, i32) {
    %c0_i32 = arith.constant 0 : i32
    %c0_i32_0 = arith.constant 0 : i32
    %c0_i32_1 = arith.constant 0 : i32
    %c0_i32_2 = arith.constant 0 : i32
    return %arg0, %c0_i32, %c0_i32_0, %c0_i32_1 : i32, i32, i32, i32
  }
  func.func @transform_1(%arg0: i32, %arg1: i32) -> (i32, i32, i32) {
    %c0_i32 = arith.constant 0 : i32
    %c0_i32_0 = arith.constant 0 : i32
    %c0_i32_1 = arith.constant 0 : i32
    %c0_i32_2 = arith.constant 0 : i32
    return %c0_i32, %c0_i32_0, %c0_i32_1 : i32, i32, i32
  }
  func.func @transform_2(%arg0: i32, %arg1: i32) -> (i32, i32) {
    %c0_i32 = arith.constant 0 : i32
    %c0_i32_0 = arith.constant 0 : i32
    %c0_i32_1 = arith.constant 0 : i32
    return %c0_i32, %c0_i32_0 : i32, i32
  }
  func.func @transform_3(%arg0: i32, %arg1: i32) -> (i32, i32) {
    %c1_i32 = arith.constant 1 : i32
    %0 = arith.muli %arg0, %c1_i32 : i32
    %1 = arith.addi %0, %arg1 : i32
    %c0_i32 = arith.constant 0 : i32
    %c0_i32_0 = arith.constant 0 : i32
    return %1, %c0_i32 : i32, i32
  }
  func.func @transform_4(%arg0: i32, %arg1: i32) -> (i32, i32, i32) {
    %c1_i32 = arith.constant 1 : i32
    %0 = arith.muli %arg0, %c1_i32 : i32
    %1 = arith.addi %0, %arg1 : i32
    %c0_i32 = arith.constant 0 : i32
    %c0_i32_0 = arith.constant 0 : i32
    %c0_i32_1 = arith.constant 0 : i32
    return %1, %c0_i32, %c0_i32_0 : i32, i32, i32
  }
}

module attributes {stable_mosaic.version = 11 : i64} {
  func.func @_bn_relu_kernel(%arg0: i32, %arg1: memref<64x128xf32, #tpu.memory_space<vmem>>, %arg2: memref<1x128xf32, #tpu.memory_space<vmem>>, %arg3: memref<1x128xf32, #tpu.memory_space<vmem>>, %arg4: memref<64x128xf32, #tpu.memory_space<vmem>>) attributes {dimension_semantics = [#tpu.dimension_semantics<parallel>], iteration_bounds = array<i64: 2>, scalar_prefetch = 0 : i64, scratch_operands = 0 : i64, tpu.core_type = #tpu.core_type<tc>, window_params = [{transform_indices = @transform_0, window_bounds = array<i64: 64, 128>}, {pipeline_mode = #tpu.pipeline_mode<synchronous>, transform_indices = @transform_1, window_bounds = array<i64: 1, 128>}, {pipeline_mode = #tpu.pipeline_mode<synchronous>, transform_indices = @transform_2, window_bounds = array<i64: 1, 128>}, {transform_indices = @transform_3, window_bounds = array<i64: 64, 128>}]} {
    %c0 = arith.constant 0 : index
    %c0_0 = arith.constant 0 : index
    %0 = vector.load %arg1[%c0, %c0_0] : memref<64x128xf32, #tpu.memory_space<vmem>>, vector<64x128xf32>
    %c0_1 = arith.constant 0 : index
    %c0_2 = arith.constant 0 : index
    %1 = vector.load %arg2[%c0_1, %c0_2] : memref<1x128xf32, #tpu.memory_space<vmem>>, vector<1x128xf32>
    %2 = vector.broadcast %1 : vector<1x128xf32> to vector<64x128xf32>
    %3 = arith.mulf %0, %2 : vector<64x128xf32>
    %c0_3 = arith.constant 0 : index
    %c0_4 = arith.constant 0 : index
    %4 = vector.load %arg3[%c0_3, %c0_4] : memref<1x128xf32, #tpu.memory_space<vmem>>, vector<1x128xf32>
    %5 = vector.broadcast %4 : vector<1x128xf32> to vector<64x128xf32>
    %6 = arith.addf %3, %5 : vector<64x128xf32>
    %cst = arith.constant 0.000000e+00 : f32
    %7 = vector.broadcast %cst : f32 to vector<64x128xf32>
    %8 = arith.maximumf %6, %7 : vector<64x128xf32>
    %c0_5 = arith.constant 0 : index
    %c0_6 = arith.constant 0 : index
    %9 = vector.load %arg4[%c0_5, %c0_6] : memref<64x128xf32, #tpu.memory_space<vmem>>, vector<64x128xf32>
    tpu.vector_store %arg4[%c0_5, %c0_6], %8 {strides = array<i32>} : memref<64x128xf32, #tpu.memory_space<vmem>>, vector<64x128xf32>,
    return
  }
  func.func @transform_0(%arg0: i32) -> (i32, i32) {
    %c0_i32 = arith.constant 0 : i32
    %c0_i32_0 = arith.constant 0 : i32
    return %arg0, %c0_i32 : i32, i32
  }
  func.func @transform_1(%arg0: i32) -> (i32, i32) {
    %c0_i32 = arith.constant 0 : i32
    %c0_i32_0 = arith.constant 0 : i32
    %c0_i32_1 = arith.constant 0 : i32
    return %c0_i32, %c0_i32_0 : i32, i32
  }
  func.func @transform_2(%arg0: i32) -> (i32, i32) {
    %c0_i32 = arith.constant 0 : i32
    %c0_i32_0 = arith.constant 0 : i32
    %c0_i32_1 = arith.constant 0 : i32
    return %c0_i32, %c0_i32_0 : i32, i32
  }
  func.func @transform_3(%arg0: i32) -> (i32, i32) {
    %c0_i32 = arith.constant 0 : i32
    %c0_i32_0 = arith.constant 0 : i32
    return %arg0, %c0_i32 : i32, i32
  }
}

</mosaic_0001>

<llo_original>
// kernel: down_forward.3
$region0: #{down_forward.3}
  #allocation0 [shape = 'u32[]', space=smem, size = 0x4, offset = 0x4, fixed_abs, tag = 'smem constant byte address 0x4 - core index']
  #allocation1 [shape = 'u32[144,128]{1,0:T(1,128)}', space=vmem, size = 0x12000, scoped, tag = 'internal scratch']
  %s0 = inlined_call_operand.vmem [shape: f32[128,128], index: 0, kind: input, shape index: {}]
  %s1 = inlined_call_operand.vmem [shape: f32[1,128], index: 1, kind: input, shape index: {}]
  %s2 = inlined_call_operand.vmem [shape: f32[1,128], index: 2, kind: input, shape index: {}]
  %s3 = inlined_call_operand.vmem [shape: f32[128,128], index: 3, kind: output, shape index: {}]
  %s4 = sld [smem:[#allocation0]]
  $region45: #{down_forward.3} parent=0
    _
  %s6 = ssub.s32 1, %s4
  %s7 = scalar_select 0, %s6, %s4
  loop: start=0, step=1, limit=4
  $region2: #{down_forward.3} parent=0 // loop_pre_header
    _
  $region3: #{down_forward.3} parent=0 // loop_header
    %s9 = sphi 0, %s13
    %p10 = scmp.ge.s32.totalorder %s9, 4
    %s19 = sphi 0, %s21
    %s22 = sphi 0, %s19
    %s23 = sphi 0, %s22
    %s39 = sphi 0, %s23
    %s43 = sphi 0, %s43
    %s45 = sphi 0, %s43
    %s46 = sphi 0, %s45
    %s60 = sphi 0, %s46
    %s64 = sphi 0, %s64
    %s66 = sphi 0, %s64
    %s67 = sphi 0, %s66
    %s81 = sphi 0, %s67
    %s87 = sphi 0, %s89
    %s90 = sphi 0, %s87
    %s91 = sphi 0, %s90
    %s107 = sphi 0, %s91
  $region4: #{down_forward.3} parent=0 // loop_header_branch
    %12 = sbr.rel (%p10) target = $region8
  $region5: #{down_forward.3} parent=0 // loop_body
    %s14 = ssub.s32 %s9, 1
    %s15 = ssub.s32 %s9, 2
    %s16 = sadd.s32 %s9, 1
    %s17 = ssub.s32 %s9, %s16
    %p18 = scmp.eq.s32.totalorder %s17, 0
    %s20 = sadd.s32 %s19, 1
    %s21 = scalar_select %p18, %s19, %s20
    %p24 = pneg %p18
    %p25 = scmp.eq.s32.totalorder %s9, 1
    %p26 = por %p24, %p25
    %p27 = scmp.ne.s32.totalorder %s19, %s22
    %p28 = scmp.eq.s32.totalorder %s9, 0
    %p29 = por %p27, %p28
    %p30 = scmp.ne.s32.totalorder %s19, %s22
    %p31 = scmp.eq.s32.totalorder %s14, 1
    %p32 = por %p30, %p31
    %p33 = scmp.ne.s32.totalorder %s22, %s23
    %p34 = scmp.eq.s32.totalorder %s14, 0
    %p35 = por %p33, %p34
    %p36 = scmp.ne.s32.totalorder %s22, %s23
    %p37 = scmp.eq.s32.totalorder %s15, 1
    %p38 = por %p36, %p37
    %p40 = scmp.ne.s32.totalorder %s23, %s39
    %p41 = scmp.eq.s32.totalorder %s15, 0
    %p42 = por %p40, %p41
    %s44 = sadd.s32 %s43, 1
    %p47 = scmp.eq.s32.totalorder %s9, 1
    %p48 = scmp.ne.s32.totalorder %s43, %s45
    %p49 = scmp.eq.s32.totalorder %s9, 0
    %p50 = por %p48, %p49
    %p51 = scmp.ne.s32.totalorder %s43, %s45
    %p52 = scmp.eq.s32.totalorder %s14, 1
    %p53 = por %p51, %p52
    %p54 = scmp.ne.s32.totalorder %s45, %s46
    %p55 = scmp.eq.s32.totalorder %s14, 0
    %p56 = por %p54, %p55
    %p57 = scmp.ne.s32.totalorder %s45, %s46
    %p58 = scmp.eq.s32.totalorder %s15, 1
    %p59 = por %p57, %p58
    %p61 = scmp.ne.s32.totalorder %s46, %s60
    %p62 = scmp.eq.s32.totalorder %s15, 0
    %p63 = por %p61, %p62
    %s65 = sadd.s32 %s64, 1
    %p68 = scmp.eq.s32.totalorder %s9, 1
    %p69 = scmp.ne.s32.totalorder %s64, %s66
    %p70 = scmp.eq.s32.totalorder %s9, 0
    %p71 = por %p69, %p70
    %p72 = scmp.ne.s32.totalorder %s64, %s66
    %p73 = scmp.eq.s32.totalorder %s14, 1
    %p74 = por %p72, %p73
    %p75 = scmp.ne.s32.totalorder %s66, %s67
    %p76 = scmp.eq.s32.totalorder %s14, 0
    %p77 = por %p75, %p76
    %p78 = scmp.ne.s32.totalorder %s66, %s67
    %p79 = scmp.eq.s32.totalorder %s15, 1
    %p80 = por %p78, %p79
    %p82 = scmp.ne.s32.totalorder %s67, %s81
    %p83 = scmp.eq.s32.totalorder %s15, 0
    %p84 = por %p82, %p83
    %s85 = ssub.s32 %s9, %s16
    %p86 = scmp.eq.s32.totalorder %s85, 0
    %s88 = sadd.s32 %s87, 1
    %s89 = scalar_select %p86, %s87, %s88
    %p92 = pneg %p86
    %p93 = scmp.eq.s32.totalorder %s9, 1
    %p94 = por %p92, %p93
    %p95 = scmp.ne.s32.totalorder %s87, %s90
    %p96 = scmp.eq.s32.totalorder %s9, 0
    %p97 = por %p95, %p96
    %p98 = scmp.ne.s32.totalorder %s87, %s90
    %p99 = scmp.eq.s32.totalorder %s14, 1
    %p100 = por %p98, %p99
    %p101 = scmp.ne.s32.totalorder %s90, %s91
    %p102 = scmp.eq.s32.totalorder %s14, 0
    %p103 = por %p101, %p102
    %p104 = scmp.ne.s32.totalorder %s90, %s91
    %p105 = scmp.eq.s32.totalorder %s15, 1
    %p106 = por %p104, %p105
    %p108 = scmp.ne.s32.totalorder %s91, %s107
    %p109 = scmp.eq.s32.totalorder %s15, 0
    %p110 = por %p108, %p109
    %p111 = scmp.le.s32.totalorder 1, %s9
    %p112 = scmp.lt.s32.totalorder %s9, 3
    %p113 = pnand %p111, %p112
    %p114 = pneg %p113
    // Predicated region
    $region9: #{down_forward.3} parent=5 // pred_check
      _
    $region10: #{down_forward.3} parent=5 // pred_check_branch
      %116 = sbr.rel (%p113) target = $region12
    $region11: #{down_forward.3} parent=5 // pred_region
      %s117 = ssub.s32 %s9, 1
      // Predicated region
      $region13: #{down_forward.3} parent=11 // pred_check
        %p118 = pneg %p56
      $region14: #{down_forward.3} parent=11 // pred_check_branch
        %120 = sbr.rel (%p118) target = $region16
      $region15: #{down_forward.3} parent=11 // pred_region
        _
      $region16: #{down_forward.3} parent=11 // pred_fallthru
        _
      // Predicated region
      $region17: #{down_forward.3} parent=11 // pred_check
        %p121 = pneg %p77
      $region18: #{down_forward.3} parent=11 // pred_check_branch
        %123 = sbr.rel (%p121) target = $region20
      $region19: #{down_forward.3} parent=11 // pred_region
        _
      $region20: #{down_forward.3} parent=11 // pred_fallthru
        _
    $region12: #{down_forward.3} parent=5 // pred_fallthru
      _
    %p124 = scmp.lt.s32.totalorder %s9, 2
    // Predicated region
    $region21: #{down_forward.3} parent=5 // pred_check
      %p125 = pneg %p124
    $region22: #{down_forward.3} parent=5 // pred_check_branch
      %127 = sbr.rel (%p125) target = $region24
    $region23: #{down_forward.3} parent=5 // pred_region
      // Predicated region
      $region25: #{down_forward.3} parent=23 // pred_check
        %p128 = pneg %p29
      $region26: #{down_forward.3} parent=23 // pred_check_branch
        %130 = sbr.rel (%p128) target = $region28
      $region27: #{down_forward.3} parent=23 // pred_region
        %s131 = smul.u32 8, %s9
        %p132 = scmp.lt.s32.totalorder %s131, 15
        %s133 = scalar_select %p132, %s131, 15
        %s134 = smul.addr %s133, 8
        %s135 = scalar_lea.vmem %s0, %s134
        %s136 = smul.u32 8, %s9
      $region28: #{down_forward.3} parent=23 // pred_fallthru
        _
    $region24: #{down_forward.3} parent=5 // pred_fallthru
      _
    %p137 = scmp.le.s32.totalorder 1, %s9
    %p138 = scmp.lt.s32.totalorder %s9, 3
    %p139 = pnand %p137, %p138
    %p140 = pneg %p139
    // Predicated region
    $region29: #{down_forward.3} parent=5 // pred_check
      _
    $region30: #{down_forward.3} parent=5 // pred_check_branch
      %142 = sbr.rel (%p139) target = $region32
    $region31: #{down_forward.3} parent=5 // pred_region
      %s143 = ssub.s32 %s9, 1
      %s144 = smul.u32 8, %s14
      %p145 = scmp.lt.s32.totalorder %s144, 15
      %s146 = scalar_select %p145, %s144, 15
      %s147 = smul.addr %s146, 8
      %s148 = scalar_lea.vmem %s0, %s147
      %p149 = pneg %p35
      %p150 = pneg %p32
      %p151 = pneg %p56
      %p152 = pneg %p53
      %p153 = pneg %p77
      %p154 = pneg %p74
      %p155 = pneg %p103
      %p156 = pneg %p100
      %s157 = smul.u32 8, %s14
      %p158 = scmp.lt.s32.totalorder %s157, 15
      %s159 = scalar_select %p158, %s157, 15
      %s160 = smul.addr %s159, 8
      %s161 = scalar_lea.vmem %s3, %s160
      %s162 = smul.u32 8, %s14
      %p163 = scmp.lt.s32.totalorder %s162, 15
      %s164 = scalar_select %p163, %s162, 15
      %s165 = smul.addr %s164, 8
      %s166 = scalar_lea.vmem %s0, %s165
      %s167 = smul.u32 8, %s14
      %s168 = smul.u32 8, %s14
      %p169 = scmp.lt.s32.totalorder %s168, 15
      %s170 = scalar_select %p169, %s168, 15
      %s171 = smul.addr %s170, 8
      %s172 = scalar_lea.vmem %s3, %s171
      %s173 = smul.u32 8, %s14
      %v174 = vld [vmem:[%s166] sm:$0xff]
      %v175 = vld [vmem:[%s166 + $0x8] sm:$0xff]
      %v176 = vld [vmem:[%s166 + $0x10] sm:$0xff]
      %v177 = vld [vmem:[%s166 + $0x18] sm:$0xff]
      %v178 = vld [vmem:[%s166 + $0x20] sm:$0xff]
      %v179 = vld [vmem:[%s166 + $0x28] sm:$0xff]
      %v180 = vld [vmem:[%s166 + $0x30] sm:$0xff]
      %v181 = vld [vmem:[%s166 + $0x38] sm:$0xff]
      %v182 = vld [vmem:[%s1] sm:$0x1]
      %v184 = vlaneseq
      %v185 = vshrl.u32 %v184, 7
      %v186 = vsub.s32 0, %v185
      %v187 = vrot.slane %v182, %v186
      %v189 = vmul.f32 %v174, %v187
      %v190 = vmul.f32 %v175, %v187
      %v191 = vmul.f32 %v176, %v187
      %v192 = vmul.f32 %v177, %v187
      %v193 = vmul.f32 %v178, %v187
      %v194 = vmul.f32 %v179, %v187
      %v195 = vmul.f32 %v180, %v187
      %v196 = vmul.f32 %v181, %v187
      %v197 = vld [vmem:[%s2] sm:$0x1]
      %v199 = vlaneseq
      %v200 = vshrl.u32 %v199, 7
      %v201 = vsub.s32 0, %v200
      %v202 = vrot.slane %v197, %v201
      %v204 = vadd.f32 %v189, %v202
      %v205 = vadd.f32 %v190, %v202
      %v206 = vadd.f32 %v191, %v202
      %v207 = vadd.f32 %v192, %v202
      %v208 = vadd.f32 %v193, %v202
      %v209 = vadd.f32 %v194, %v202
      %v210 = vadd.f32 %v195, %v202
      %v211 = vadd.f32 %v196, %v202
      %v212 = vmax.f32 %v204, 0.0
      %v213 = vmax.f32 %v205, 0.0
      %v214 = vmax.f32 %v206, 0.0
      %v215 = vmax.f32 %v207, 0.0
      %v216 = vmax.f32 %v208, 0.0
      %v217 = vmax.f32 %v209, 0.0
      %v218 = vmax.f32 %v210, 0.0
      %v219 = vmax.f32 %v211, 0.0
      %220 = vst [vmem:[%s172] sm:$0xff] %v212
      %221 = vst [vmem:[%s172 + $0x8] sm:$0xff] %v213
      %222 = vst [vmem:[%s172 + $0x10] sm:$0xff] %v214
      %223 = vst [vmem:[%s172 + $0x18] sm:$0xff] %v215
      %224 = vst [vmem:[%s172 + $0x20] sm:$0xff] %v216
      %225 = vst [vmem:[%s172 + $0x28] sm:$0xff] %v217
      %226 = vst [vmem:[%s172 + $0x30] sm:$0xff] %v218
      %227 = vst [vmem:[%s172 + $0x38] sm:$0xff] %v219
      %s228 = smul.u32 8, %s14
      %p229 = scmp.lt.s32.totalorder %s228, 15
      %s230 = scalar_select %p229, %s228, 15
      %s231 = smul.addr %s230, 8
      %s232 = scalar_lea.vmem %s3, %s231
      // Predicated region
      $region33: #{down_forward.3} parent=31 // pred_check
        %p233 = pneg %p100
      $region34: #{down_forward.3} parent=31 // pred_check_branch
        %235 = sbr.rel (%p233) target = $region36
      $region35: #{down_forward.3} parent=31 // pred_region
        %s236 = smul.u32 8, %s14
      $region36: #{down_forward.3} parent=31 // pred_fallthru
        _
    $region32: #{down_forward.3} parent=5 // pred_fallthru
      _
    %p237 = scmp.le.s32.totalorder 2, %s9
    // Predicated region
    $region37: #{down_forward.3} parent=5 // pred_check
      %p238 = pneg %p237
    $region38: #{down_forward.3} parent=5 // pred_check_branch
      %240 = sbr.rel (%p238) target = $region40
    $region39: #{down_forward.3} parent=5 // pred_region
      %s241 = ssub.s32 %s9, 2
      // Predicated region
      $region41: #{down_forward.3} parent=39 // pred_check
        %p242 = pneg %p106
      $region42: #{down_forward.3} parent=39 // pred_check_branch
        %244 = sbr.rel (%p242) target = $region44
      $region43: #{down_forward.3} parent=39 // pred_region
        %s245 = smul.u32 8, %s15
        %p246 = scmp.lt.s32.totalorder %s245, 15
        %s247 = scalar_select %p246, %s245, 15
        %s248 = smul.addr %s247, 8
        %s249 = scalar_lea.vmem %s3, %s248
      $region44: #{down_forward.3} parent=39 // pred_fallthru
        _
    $region40: #{down_forward.3} parent=5 // pred_fallthru
      _
  $region6: #{down_forward.3} parent=0 // loop_footer
    %s13 = sadd.s32 1, %s9
  $region7: #{down_forward.3} parent=0 // loop_footer_branch
    %8 = sbr.rel target = $region3
  $region8: #{down_forward.3} parent=0 // loop_exit
    _

// kernel: down_forward.2
$region0: #{down_forward.2}
  #allocation0 [shape = 'u32[]', space=smem, size = 0x4, offset = 0x4, fixed_abs, tag = 'smem constant byte address 0x4 - core index']
  #allocation1 [shape = 'u32[144,128]{1,0:T(1,128)}', space=vmem, size = 0x12000, scoped, tag = 'internal scratch']
  %s0 = inlined_call_operand.vmem [shape: f32[2,9,9,16], index: 0, kind: input, shape index: {}]
  %s1 = inlined_call_operand.vmem [shape: f32[4,16,128], index: 1, kind: input, shape index: {}]
  %s2 = inlined_call_operand.vmem [shape: f32[1,128], index: 2, kind: input, shape index: {}]
  %s3 = inlined_call_operand.vmem [shape: f32[128,128], index: 3, kind: output, shape index: {0}]
  %s4 = inlined_call_operand.vmem [shape: f32[2,2,128], index: 4, kind: output, shape index: {1}]
  %5 = xla_tuple %s3, %s4
  %s6 = sld [smem:[#allocation0]]
  $region53: #{down_forward.2} parent=0
    _
  %s8 = ssub.s32 1, %s6
  %s9 = scalar_select 0, %s8, %s6
  loop: start=0, step=1, limit=4
  $region2: #{down_forward.2} parent=0 // loop_pre_header
    _
  $region3: #{down_forward.2} parent=0 // loop_header
    %s11 = sphi 0, %s15
    %p12 = scmp.ge.s32.totalorder %s11, 4
    %s18 = sphi 0, %s30
    %s19 = sphi 0, %s26
    %s20 = sphi 0, %s18
    %s21 = sphi 0, %s19
    %s22 = sphi 0, %s20
    %s23 = sphi 0, %s21
    %s33 = sphi 0, %s35
    %s36 = sphi 0, %s33
    %s37 = sphi 0, %s36
    %s53 = sphi 0, %s37
    %s57 = sphi 0, %s57
    %s59 = sphi 0, %s57
    %s60 = sphi 0, %s59
    %s74 = sphi 0, %s60
    %s78 = sphi 0, %s78
    %s80 = sphi 0, %s78
    %s81 = sphi 0, %s80
    %s95 = sphi 0, %s81
    %s103 = sphi 0, %s105
    %s106 = sphi 0, %s103
    %s107 = sphi 0, %s106
    %s123 = sphi 0, %s107
    %s131 = sphi 0, %s133
    %s134 = sphi 0, %s131
    %s135 = sphi 0, %s134
    %s151 = sphi 0, %s135
  $region4: #{down_forward.2} parent=0 // loop_header_branch
    %14 = sbr.rel (%p12) target = $region8
  $region5: #{down_forward.2} parent=0 // loop_body
    %s16 = ssub.s32 %s11, 1
    %s17 = ssub.s32 %s11, 2
    %s24 = sadd.s32 1, %s19
    %p25 = scmp.ge.s32.totalorder %s24, 1
    %s26 = scalar_select %p25, 0, %s24
    %s27 = sadd.s32 1, %s18
    %s28 = scalar_select %p25, %s27, %s18
    %p29 = scmp.ge.s32.totalorder %s28, 2
    %s30 = scalar_select %p29, 0, %s28
    %s31 = ssub.s32 %s18, %s30
    %p32 = scmp.eq.s32.totalorder %s31, 0
    %s34 = sadd.s32 %s33, 1
    %s35 = scalar_select %p32, %s33, %s34
    %p38 = pneg %p32
    %p39 = scmp.eq.s32.totalorder %s11, 1
    %p40 = por %p38, %p39
    %p41 = scmp.ne.s32.totalorder %s33, %s36
    %p42 = scmp.eq.s32.totalorder %s11, 0
    %p43 = por %p41, %p42
    %p44 = scmp.ne.s32.totalorder %s33, %s36
    %p45 = scmp.eq.s32.totalorder %s16, 1
    %p46 = por %p44, %p45
    %p47 = scmp.ne.s32.totalorder %s36, %s37
    %p48 = scmp.eq.s32.totalorder %s16, 0
    %p49 = por %p47, %p48
    %p50 = scmp.ne.s32.totalorder %s36, %s37
    %p51 = scmp.eq.s32.totalorder %s17, 1
    %p52 = por %p50, %p51
    %p54 = scmp.ne.s32.totalorder %s37, %s53
    %p55 = scmp.eq.s32.totalorder %s17, 0
    %p56 = por %p54, %p55
    %s58 = sadd.s32 %s57, 1
    %p61 = scmp.eq.s32.totalorder %s11, 1
    %p62 = scmp.ne.s32.totalorder %s57, %s59
    %p63 = scmp.eq.s32.totalorder %s11, 0
    %p64 = por %p62, %p63
    %p65 = scmp.ne.s32.totalorder %s57, %s59
    %p66 = scmp.eq.s32.totalorder %s16, 1
    %p67 = por %p65, %p66
    %p68 = scmp.ne.s32.totalorder %s59, %s60
    %p69 = scmp.eq.s32.totalorder %s16, 0
    %p70 = por %p68, %p69
    %p71 = scmp.ne.s32.totalorder %s59, %s60
    %p72 = scmp.eq.s32.totalorder %s17, 1
    %p73 = por %p71, %p72
    %p75 = scmp.ne.s32.totalorder %s60, %s74
    %p76 = scmp.eq.s32.totalorder %s17, 0
    %p77 = por %p75, %p76
    %s79 = sadd.s32 %s78, 1
    %p82 = scmp.eq.s32.totalorder %s11, 1
    %p83 = scmp.ne.s32.totalorder %s78, %s80
    %p84 = scmp.eq.s32.totalorder %s11, 0
    %p85 = por %p83, %p84
    %p86 = scmp.ne.s32.totalorder %s78, %s80
    %p87 = scmp.eq.s32.totalorder %s16, 1
    %p88 = por %p86, %p87
    %p89 = scmp.ne.s32.totalorder %s80, %s81
    %p90 = scmp.eq.s32.totalorder %s16, 0
    %p91 = por %p89, %p90
    %p92 = scmp.ne.s32.totalorder %s80, %s81
    %p93 = scmp.eq.s32.totalorder %s17, 1
    %p94 = por %p92, %p93
    %p96 = scmp.ne.s32.totalorder %s81, %s95
    %p97 = scmp.eq.s32.totalorder %s17, 0
    %p98 = por %p96, %p97
    %s99 = sadd.s32 %s18, %s19
    %s100 = sadd.s32 %s30, %s26
    %s101 = ssub.s32 %s99, %s100
    %p102 = scmp.eq.s32.totalorder %s101, 0
    %s104 = sadd.s32 %s103, 1
    %s105 = scalar_select %p102, %s103, %s104
    %p108 = pneg %p102
    %p109 = scmp.eq.s32.totalorder %s11, 1
    %p110 = por %p108, %p109
    %p111 = scmp.ne.s32.totalorder %s103, %s106
    %p112 = scmp.eq.s32.totalorder %s11, 0
    %p113 = por %p111, %p112
    %p114 = scmp.ne.s32.totalorder %s103, %s106
    %p115 = scmp.eq.s32.totalorder %s16, 1
    %p116 = por %p114, %p115
    %p117 = scmp.ne.s32.totalorder %s106, %s107
    %p118 = scmp.eq.s32.totalorder %s16, 0
    %p119 = por %p117, %p118
    %p120 = scmp.ne.s32.totalorder %s106, %s107
    %p121 = scmp.eq.s32.totalorder %s17, 1
    %p122 = por %p120, %p121
    %p124 = scmp.ne.s32.totalorder %s107, %s123
    %p125 = scmp.eq.s32.totalorder %s17, 0
    %p126 = por %p124, %p125
    %s127 = sadd.s32 %s18, %s19
    %s128 = sadd.s32 %s30, %s26
    %s129 = ssub.s32 %s127, %s128
    %p130 = scmp.eq.s32.totalorder %s129, 0
    %s132 = sadd.s32 %s131, 1
    %s133 = scalar_select %p130, %s131, %s132
    %p136 = pneg %p130
    %p137 = scmp.eq.s32.totalorder %s11, 1
    %p138 = por %p136, %p137
    %p139 = scmp.ne.s32.totalorder %s131, %s134
    %p140 = scmp.eq.s32.totalorder %s11, 0
    %p141 = por %p139, %p140
    %p142 = scmp.ne.s32.totalorder %s131, %s134
    %p143 = scmp.eq.s32.totalorder %s16, 1
    %p144 = por %p142, %p143
    %p145 = scmp.ne.s32.totalorder %s134, %s135
    %p146 = scmp.eq.s32.totalorder %s16, 0
    %p147 = por %p145, %p146
    %p148 = scmp.ne.s32.totalorder %s134, %s135
    %p149 = scmp.eq.s32.totalorder %s17, 1
    %p150 = por %p148, %p149
    %p152 = scmp.ne.s32.totalorder %s135, %s151
    %p153 = scmp.eq.s32.totalorder %s17, 0
    %p154 = por %p152, %p153
    %p155 = scmp.le.s32.totalorder 1, %s11
    %p156 = scmp.lt.s32.totalorder %s11, 3
    %p157 = pnand %p155, %p156
    %p158 = pneg %p157
    // Predicated region
    $region9: #{down_forward.2} parent=5 // pred_check
      _
    $region10: #{down_forward.2} parent=5 // pred_check_branch
      %160 = sbr.rel (%p157) target = $region12
    $region11: #{down_forward.2} parent=5 // pred_region
      %s161 = ssub.s32 %s11, 1
      // Predicated region
      $region13: #{down_forward.2} parent=11 // pred_check
        %p162 = pneg %p70
      $region14: #{down_forward.2} parent=11 // pred_check_branch
        %164 = sbr.rel (%p162) target = $region16
      $region15: #{down_forward.2} parent=11 // pred_region
        _
      $region16: #{down_forward.2} parent=11 // pred_fallthru
        _
      // Predicated region
      $region17: #{down_forward.2} parent=11 // pred_check
        %p165 = pneg %p91
      $region18: #{down_forward.2} parent=11 // pred_check_branch
        %167 = sbr.rel (%p165) target = $region20
      $region19: #{down_forward.2} parent=11 // pred_region
        _
      $region20: #{down_forward.2} parent=11 // pred_fallthru
        _
    $region12: #{down_forward.2} parent=5 // pred_fallthru
      _
    %p168 = scmp.lt.s32.totalorder %s11, 2
    // Predicated region
    $region21: #{down_forward.2} parent=5 // pred_check
      %p169 = pneg %p168
    $region22: #{down_forward.2} parent=5 // pred_check_branch
      %171 = sbr.rel (%p169) target = $region24
    $region23: #{down_forward.2} parent=5 // pred_region
      // Predicated region
      $region25: #{down_forward.2} parent=23 // pred_check
        %p172 = pneg %p43
      $region26: #{down_forward.2} parent=23 // pred_check_branch
        %174 = sbr.rel (%p172) target = $region28
      $region27: #{down_forward.2} parent=23 // pred_region
        %p175 = scmp.lt.s32.totalorder %s18, 1
        %s176 = scalar_select %p175, %s18, 1
        %s177 = smul.addr %s176, 18
        %s178 = smul.addr %s177, 8
        %s179 = scalar_lea.vmem %s0, %s178
      $region28: #{down_forward.2} parent=23 // pred_fallthru
        _
    $region24: #{down_forward.2} parent=5 // pred_fallthru
      _
    %p180 = scmp.le.s32.totalorder 1, %s11
    %p181 = scmp.lt.s32.totalorder %s11, 3
    %p182 = pnand %p180, %p181
    %p183 = pneg %p182
    // Predicated region
    $region29: #{down_forward.2} parent=5 // pred_check
      _
    $region30: #{down_forward.2} parent=5 // pred_check_branch
      %185 = sbr.rel (%p182) target = $region32
    $region31: #{down_forward.2} parent=5 // pred_region
      %s186 = ssub.s32 %s11, 1
      %p187 = scmp.lt.s32.totalorder %s20, 1
      %s188 = scalar_select %p187, %s20, 1
      %s189 = smul.addr %s188, 18
      %s190 = smul.addr %s189, 8
      %s191 = scalar_lea.vmem %s0, %s190
      %p192 = pneg %p49
      %p193 = pneg %p46
      %p194 = pneg %p70
      %p195 = pneg %p67
      %p196 = pneg %p91
      %p197 = pneg %p88
      %p198 = pneg %p119
      %p199 = pneg %p116
      %s200 = sadd.s32 %s20, %s21
      %s201 = smul.u32 8, %s200
      %p202 = scmp.lt.s32.totalorder %s201, 15
      %s203 = scalar_select %p202, %s201, 15
      %s204 = smul.addr %s203, 8
      %s205 = scalar_lea.vmem %s3, %s204
      %p206 = pneg %p147
      %p207 = pneg %p144
      %s208 = sadd.s32 %s20, %s21
      %p209 = scmp.lt.s32.totalorder %s208, 1
      %s210 = scalar_select %p209, %s208, 1
      %s211 = smul.addr %s210, 2
      %s212 = scalar_lea.vmem %s4, %s211
      %p213 = scmp.lt.s32.totalorder %s20, 1
      %s214 = scalar_select %p213, %s20, 1
      %s215 = smul.addr %s214, 18
      %s216 = smul.addr %s215, 8
      %s217 = scalar_lea.vmem %s0, %s216
      %s218 = sadd.s32 %s20, %s21
      %s219 = smul.u32 8, %s218
      %p220 = scmp.lt.s32.totalorder %s219, 15
      %s221 = scalar_select %p220, %s219, 15
      %s222 = smul.addr %s221, 8
      %s223 = scalar_lea.vmem %s3, %s222
      %s224 = sadd.s32 %s20, %s21
      %s225 = smul.u32 8, %s224
      %s226 = sadd.s32 %s20, %s21
      %p227 = scmp.lt.s32.totalorder %s226, 1
      %s228 = scalar_select %p227, %s226, 1
      %s229 = smul.addr %s228, 2
      %s230 = scalar_lea.vmem %s4, %s229
      %s231 = sadd.s32 %s20, %s21
      %s232 = smul.u32 %s21, 8
      %s233 = smul.u32 %s232, 16
      %s234 = scalar_lea.vmem %s217, %s233
      %v235 = vld [vmem:[%s234] sm:$0xff]
      %v236 = vld [vmem:[%s234 + $0x10] sm:$0xff]
      %v237 = vld [vmem:[%s234 + $0x20] sm:$0xff]
      %v238 = vld [vmem:[%s234 + $0x30] sm:$0xff]
      %v239 = vld [vmem:[%s234 + $0x40] sm:$0xff]
      %v240 = vld [vmem:[%s234 + $0x50] sm:$0xff]
      %v241 = vld [vmem:[%s234 + $0x60] sm:$0xff]
      %v242 = vld [vmem:[%s234 + $0x70] sm:$0xff]
      %v243 = vld [vmem:[%s1] sm:$0xff]
      %v244 = vld [vmem:[%s1 + $0x8] sm:$0xff]
      %v245 = vld [vmem:[%s234 + $0x1] sm:$0xff]
      %v246 = vld [vmem:[%s234 + $0x11] sm:$0xff]
      %v247 = vld [vmem:[%s234 + $0x21] sm:$0xff]
      %v248 = vld [vmem:[%s234 + $0x31] sm:$0xff]
      %v249 = vld [vmem:[%s234 + $0x41] sm:$0xff]
      %v250 = vld [vmem:[%s234 + $0x51] sm:$0xff]
      %v251 = vld [vmem:[%s234 + $0x61] sm:$0xff]
      %v252 = vld [vmem:[%s234 + $0x71] sm:$0xff]
      %s253 = scalar_lea.vmem %s1, 16
      %v254 = vld [vmem:[%s253] sm:$0xff]
      %v255 = vld [vmem:[%s253 + $0x8] sm:$0xff]
      %vm256 = vcmask 130048
      %v258 = vsel %vm256, %v245, 0
      %v261 = vsel %vm256, %v246, 0
      %v264 = vsel %vm256, %v247, 0
      %v267 = vsel %vm256, %v248, 0
      %v270 = vsel %vm256, %v249, 0
      %v273 = vsel %vm256, %v250, 0
      %v276 = vsel %vm256, %v251, 0
      %v279 = vsel %vm256, %v252, 0
      %281 = vmatprep.subr.mxu0 0.0
      %282 = vmatpush1.msra.mxu0 %v254
      %283 = vmatprep.subr.mxu0 0.0
      %284 = vmatpush1.msra.mxu0 %v255
      %285 = vmatprep.subr.mxu0 0.0
      %286 = vmatpush1.msra.mxu0 0.0
      %287 = vmatprep.subr.mxu0 0.0
      %288 = vmatpush1.msra.mxu0 0.0
      %289 = vmatprep.subr.mxu0 0.0
      %290 = vmatpush1.msra.mxu0 0.0
      %291 = vmatprep.subr.mxu0 0.0
      %292 = vmatpush1.msra.mxu0 0.0
      %293 = vmatprep.subr.mxu0 0.0
      %294 = vmatpush1.msra.mxu0 0.0
      %295 = vmatprep.subr.mxu0 0.0
      %296 = vmatpush1.msra.mxu0 0.0
      %297 = vmatprep.subr.mxu0 0.0
      %298 = vmatpush1.msra.mxu0 0.0
      %299 = vmatprep.subr.mxu0 0.0
      %300 = vmatpush1.msra.mxu0 0.0
      %301 = vmatprep.subr.mxu0 0.0
      %302 = vmatpush1.msra.mxu0 0.0
      %303 = vmatprep.subr.mxu0 0.0
      %304 = vmatpush1.msra.mxu0 0.0
      %305 = vmatprep.subr.mxu0 0.0
      %306 = vmatpush1.msra.mxu0 0.0
      %307 = vmatprep.subr.mxu0 0.0
      %308 = vmatpush1.msra.mxu0 0.0
      %309 = vmatprep.subr.mxu0 0.0
      %310 = vmatpush1.msra.mxu0 0.0
      %311 = vmatprep.subr.mxu0 0.0
      %312 = vmatpush1.msra.mxu0 0.0
      %313 = vmatprep.subr.mxu0 0.0
      %314 = vmatpush1.msra.mxu0 0.0
      %315 = vmatprep.subr.mxu0 0.0
      %316 = vmatpush1.msra.mxu0 0.0
      %317 = vmatprep.subr.mxu0 0.0
      %318 = vmatpush1.msra.mxu0 0.0
      %319 = vmatprep.subr.mxu0 0.0
      %320 = vmatpush1.msra.mxu0 0.0
      %321 = vmatprep.subr.mxu0 0.0
      %322 = vmatpush1.msra.mxu0 0.0
      %323 = vmatprep.subr.mxu0 0.0
      %324 = vmatpush1.msra.mxu0 0.0
      %325 = vmatprep.subr.mxu0 0.0
      %326 = vmatpush1.msra.mxu0 0.0
      %327 = vmatprep.subr.mxu0 0.0
      %328 = vmatpush1.msra.mxu0 0.0
      %329 = vmatprep.subr.mxu0 0.0
      %330 = vmatpush1.msra.mxu0 0.0
      %331 = vmatprep.subr.mxu0 0.0
      %332 = vmatpush1.msra.mxu0 0.0
      %333 = vmatprep.subr.mxu0 0.0
      %334 = vmatpush1.msra.mxu0 0.0
      %335 = vmatprep.subr.mxu0 0.0
      %336 = vmatpush1.msra.mxu0 0.0
      %337 = vmatprep.subr.mxu0 0.0
      %338 = vmatpush1.msra.mxu0 0.0
      %339 = vmatprep.subr.mxu0 0.0
      %340 = vmatpush1.msra.mxu0 0.0
      %341 = vmatprep.subr.mxu0 0.0
      %342 = vmatpush1.msra.mxu0 0.0
      %343 = vmatprep.subr.mxu0 0.0
      %344 = vmatpush1.msra.mxu0 0.0
      %345 = vmatprep.mubr.f32.mxu0 0.0
      %346 = vmatmul.mubr.f32.gmra.mrb[0].mxu0 %v258
      %v347 = vpop.f32.mrb[0].mxu0
      %v348 = vadd.f32 0.0, %v347
      %v349 = vpop.f32.mrb[0].mxu0
      %350 = vmatprep.mubr.f32.mxu0 0.0
      %351 = vmatmul.mubr.f32.gmra.mrb[0].mxu0 %v261
      %v352 = vpop.f32.mrb[0].mxu0
      %v353 = vadd.f32 0.0, %v352
      %v354 = vpop.f32.mrb[0].mxu0
      %355 = vmatprep.mubr.f32.mxu0 0.0
      %356 = vmatmul.mubr.f32.gmra.mrb[0].mxu0 %v264
      %v357 = vpop.f32.mrb[0].mxu0
      %v358 = vadd.f32 0.0, %v357
      %v359 = vpop.f32.mrb[0].mxu0
      %360 = vmatprep.mubr.f32.mxu0 0.0
      %361 = vmatmul.mubr.f32.gmra.mrb[0].mxu0 %v267
      %v362 = vpop.f32.mrb[0].mxu0
      %v363 = vadd.f32 0.0, %v362
      %v364 = vpop.f32.mrb[0].mxu0
      %365 = vmatprep.mubr.f32.mxu0 0.0
      %366 = vmatmul.mubr.f32.gmra.mrb[0].mxu0 %v270
      %v367 = vpop.f32.mrb[0].mxu0
      %v368 = vadd.f32 0.0, %v367
      %v369 = vpop.f32.mrb[0].mxu0
      %370 = vmatprep.mubr.f32.mxu0 0.0
      %371 = vmatmul.mubr.f32.gmra.mrb[0].mxu0 %v273
      %v372 = vpop.f32.mrb[0].mxu0
      %v373 = vadd.f32 0.0, %v372
      %v374 = vpop.f32.mrb[0].mxu0
      %375 = vmatprep.mubr.f32.mxu0 0.0
      %376 = vmatmul.mubr.f32.gmra.mrb[0].mxu0 %v276
      %v377 = vpop.f32.mrb[0].mxu0
      %v378 = vadd.f32 0.0, %v377
      %v379 = vpop.f32.mrb[0].mxu0
      %380 = vmatprep.mubr.f32.mxu0 0.0
      %381 = vmatmul.mubr.f32.gmra.mrb[0].mxu0 %v279
      %v382 = vpop.f32.mrb[0].mxu0
      %v383 = vadd.f32 0.0, %v382
      %v384 = vpop.f32.mrb[0].mxu0
      %385 = vdwg.mxu0
      %v387 = vsel %vm256, %v235, 0
      %v390 = vsel %vm256, %v236, 0
      %v393 = vsel %vm256, %v237, 0
      %v396 = vsel %vm256, %v238, 0
      %v399 = vsel %vm256, %v239, 0
      %v402 = vsel %vm256, %v240, 0
      %v405 = vsel %vm256, %v241, 0
      %v408 = vsel %vm256, %v242, 0
      %410 = vmatprep.subr.mxu0 0.0
      %411 = vmatpush1.msra.mxu0 %v243
      %412 = vmatprep.subr.mxu0 0.0
      %413 = vmatpush1.msra.mxu0 %v244
      %414 = vmatprep.subr.mxu0 0.0
      %415 = vmatpush1.msra.mxu0 0.0
      %416 = vmatprep.subr.mxu0 0.0
      %417 = vmatpush1.msra.mxu0 0.0
      %418 = vmatprep.subr.mxu0 0.0
      %419 = vmatpush1.msra.mxu0 0.0
      %420 = vmatprep.subr.mxu0 0.0
      %421 = vmatpush1.msra.mxu0 0.0
      %422 = vmatprep.subr.mxu0 0.0
      %423 = vmatpush1.msra.mxu0 0.0
      %424 = vmatprep.subr.mxu0 0.0
      %425 = vmatpush1.msra.mxu0 0.0
      %426 = vmatprep.subr.mxu0 0.0
      %427 = vmatpush1.msra.mxu0 0.0
      %428 = vmatprep.subr.mxu0 0.0
      %429 = vmatpush1.msra.mxu0 0.0
      %430 = vmatprep.subr.mxu0 0.0
      %431 = vmatpush1.msra.mxu0 0.0
      %432 = vmatprep.subr.mxu0 0.0
      %433 = vmatpush1.msra.mxu0 0.0
      %434 = vmatprep.subr.mxu0 0.0
      %435 = vmatpush1.msra.mxu0 0.0
      %436 = vmatprep.subr.mxu0 0.0
      %437 = vmatpush1.msra.mxu0 0.0
      %438 = vmatprep.subr.mxu0 0.0
      %439 = vmatpush1.msra.mxu0 0.0
      %440 = vmatprep.subr.mxu0 0.0
      %441 = vmatpush1.msra.mxu0 0.0
      %442 = vmatprep.subr.mxu0 0.0
      %443 = vmatpush1.msra.mxu0 0.0
      %444 = vmatprep.subr.mxu0 0.0
      %445 = vmatpush1.msra.mxu0 0.0
      %446 = vmatprep.subr.mxu0 0.0
      %447 = vmatpush1.msra.mxu0 0.0
      %448 = vmatprep.subr.mxu0 0.0
      %449 = vmatpush1.msra.mxu0 0.0
      %450 = vmatprep.subr.mxu0 0.0
      %451 = vmatpush1.msra.mxu0 0.0
      %452 = vmatprep.subr.mxu0 0.0
      %453 = vmatpush1.msra.mxu0 0.0
      %454 = vmatprep.subr.mxu0 0.0
      %455 = vmatpush1.msra.mxu0 0.0
      %456 = vmatprep.subr.mxu0 0.0
      %457 = vmatpush1.msra.mxu0 0.0
      %458 = vmatprep.subr.mxu0 0.0
      %459 = vmatpush1.msra.mxu0 0.0
      %460 = vmatprep.subr.mxu0 0.0
      %461 = vmatpush1.msra.mxu0 0.0
      %462 = vmatprep.subr.mxu0 0.0
      %463 = vmatpush1.msra.mxu0 0.0
      %464 = vmatprep.subr.mxu0 0.0
      %465 = vmatpush1.msra.mxu0 0.0
      %466 = vmatprep.subr.mxu0 0.0
      %467 = vmatpush1.msra.mxu0 0.0
      %468 = vmatprep.subr.mxu0 0.0
      %469 = vmatpush1.msra.mxu0 0.0
      %470 = vmatprep.subr.mxu0 0.0
      %471 = vmatpush1.msra.mxu0 0.0
      %472 = vmatprep.subr.mxu0 0.0
      %473 = vmatpush1.msra.mxu0 0.0
      %474 = vmatprep.mubr.f32.mxu0 0.0
      %475 = vmatmul.mubr.f32.gmra.mrb[0].mxu0 %v387
      %v476 = vpop.f32.mrb[0].mxu0
      %v477 = vadd.f32 %v348, %v476
      %v478 = vpop.f32.mrb[0].mxu0
      %479 = vmatprep.mubr.f32.mxu0 0.0
      %480 = vmatmul.mubr.f32.gmra.mrb[0].mxu0 %v390
      %v481 = vpop.f32.mrb[0].mxu0
      %v482 = vadd.f32 %v353, %v481
      %v483 = vpop.f32.mrb[0].mxu0
      %484 = vmatprep.mubr.f32.mxu0 0.0
      %485 = vmatmul.mubr.f32.gmra.mrb[0].mxu0 %v393
      %v486 = vpop.f32.mrb[0].mxu0
      %v487 = vadd.f32 %v358, %v486
      %v488 = vpop.f32.mrb[0].mxu0
      %489 = vmatprep.mubr.f32.mxu0 0.0
      %490 = vmatmul.mubr.f32.gmra.mrb[0].mxu0 %v396
      %v491 = vpop.f32.mrb[0].mxu0
      %v492 = vadd.f32 %v363, %v491
      %v493 = vpop.f32.mrb[0].mxu0
      %494 = vmatprep.mubr.f32.mxu0 0.0
      %495 = vmatmul.mubr.f32.gmra.mrb[0].mxu0 %v399
      %v496 = vpop.f32.mrb[0].mxu0
      %v497 = vadd.f32 %v368, %v496
      %v498 = vpop.f32.mrb[0].mxu0
      %499 = vmatprep.mubr.f32.mxu0 0.0
      %500 = vmatmul.mubr.f32.gmra.mrb[0].mxu0 %v402
      %v501 = vpop.f32.mrb[0].mxu0
      %v502 = vadd.f32 %v373, %v501
      %v503 = vpop.f32.mrb[0].mxu0
      %504 = vmatprep.mubr.f32.mxu0 0.0
      %505 = vmatmul.mubr.f32.gmra.mrb[0].mxu0 %v405
      %v506 = vpop.f32.mrb[0].mxu0
      %v507 = vadd.f32 %v378, %v506
      %v508 = vpop.f32.mrb[0].mxu0
      %509 = vmatprep.mubr.f32.mxu0 0.0
      %510 = vmatmul.mubr.f32.gmra.mrb[0].mxu0 %v408
      %v511 = vpop.f32.mrb[0].mxu0
      %v512 = vadd.f32 %v383, %v511
      %v513 = vpop.f32.mrb[0].mxu0
      %514 = vdwg.mxu0
      %s515 = sadd.s32 %s232, 1
      %s516 = smul.u32 %s515, 16
      %s517 = scalar_lea.vmem %s217, %s516
      %v518 = vld [vmem:[%s517] sm:$0xff]
      %v519 = vld [vmem:[%s517 + $0x10] sm:$0xff]
      %v520 = vld [vmem:[%s517 + $0x20] sm:$0xff]
      %v521 = vld [vmem:[%s517 + $0x30] sm:$0xff]
      %v522 = vld [vmem:[%s517 + $0x40] sm:$0xff]
      %v523 = vld [vmem:[%s517 + $0x50] sm:$0xff]
      %v524 = vld [vmem:[%s517 + $0x60] sm:$0xff]
      %v525 = vld [vmem:[%s517 + $0x70] sm:$0xff]
      %s526 = scalar_lea.vmem %s1, 32
      %v527 = vld [vmem:[%s526] sm:$0xff]
      %v528 = vld [vmem:[%s526 + $0x8] sm:$0xff]
      %v530 = vsel %vm256, %v518, 0
      %v533 = vsel %vm256, %v519, 0
      %v536 = vsel %vm256, %v520, 0
      %v539 = vsel %vm256, %v521, 0
      %v542 = vsel %vm256, %v522, 0
      %v545 = vsel %vm256, %v523, 0
      %v548 = vsel %vm256, %v524, 0
      %v551 = vsel %vm256, %v525, 0
      %553 = vmatprep.subr.mxu0 0.0
      %554 = vmatpush1.msra.mxu0 %v527
      %555 = vmatprep.subr.mxu0 0.0
      %556 = vmatpush1.msra.mxu0 %v528
      %557 = vmatprep.subr.mxu0 0.0
      %558 = vmatpush1.msra.mxu0 0.0
      %559 = vmatprep.subr.mxu0 0.0
      %560 = vmatpush1.msra.mxu0 0.0
      %561 = vmatprep.subr.mxu0 0.0
      %562 = vmatpush1.msra.mxu0 0.0
      %563 = vmatprep.subr.mxu0 0.0
      %564 = vmatpush1.msra.mxu0 0.0
      %565 = vmatprep.subr.mxu0 0.0
      %566 = vmatpush1.msra.mxu0 0.0
      %567 = vmatprep.subr.mxu0 0.0
      %568 = vmatpush1.msra.mxu0 0.0
      %569 = vmatprep.subr.mxu0 0.0
      %570 = vmatpush1.msra.mxu0 0.0
      %571 = vmatprep.subr.mxu0 0.0
      %572 = vmatpush1.msra.mxu0 0.0
      %573 = vmatprep.subr.mxu0 0.0
      %574 = vmatpush1.msra.mxu0 0.0
      %575 = vmatprep.subr.mxu0 0.0
      %576 = vmatpush1.msra.mxu0 0.0
      %577 = vmatprep.subr.mxu0 0.0
      %578 = vmatpush1.msra.mxu0 0.0
      %579 = vmatprep.subr.mxu0 0.0
      %580 = vmatpush1.msra.mxu0 0.0
      %581 = vmatprep.subr.mxu0 0.0
      %582 = vmatpush1.msra.mxu0 0.0
      %583 = vmatprep.subr.mxu0 0.0
      %584 = vmatpush1.msra.mxu0 0.0
      %585 = vmatprep.subr.mxu0 0.0
      %586 = vmatpush1.msra.mxu0 0.0
      %587 = vmatprep.subr.mxu0 0.0
      %588 = vmatpush1.msra.mxu0 0.0
      %589 = vmatprep.subr.mxu0 0.0
      %590 = vmatpush1.msra.mxu0 0.0
      %591 = vmatprep.subr.mxu0 0.0
      %592 = vmatpush1.msra.mxu0 0.0
      %593 = vmatprep.subr.mxu0 0.0
      %594 = vmatpush1.msra.mxu0 0.0
      %595 = vmatprep.subr.mxu0 0.0
      %596 = vmatpush1.msra.mxu0 0.0
      %597 = vmatprep.subr.mxu0 0.0
      %598 = vmatpush1.msra.mxu0 0.0
      %599 = vmatprep.subr.mxu0 0.0
      %600 = vmatpush1.msra.mxu0 0.0
      %601 = vmatprep.subr.mxu0 0.0
      %602 = vmatpush1.msra.mxu0 0.0
      %603 = vmatprep.subr.mxu0 0.0
      %604 = vmatpush1.msra.mxu0 0.0
      %605 = vmatprep.subr.mxu0 0.0
      %606 = vmatpush1.msra.mxu0 0.0
      %607 = vmatprep.subr.mxu0 0.0
      %608 = vmatpush1.msra.mxu0 0.0
      %609 = vmatprep.subr.mxu0 0.0
      %610 = vmatpush1.msra.mxu0 0.0
      %611 = vmatprep.subr.mxu0 0.0
      %612 = vmatpush1.msra.mxu0 0.0
      %613 = vmatprep.subr.mxu0 0.0
      %614 = vmatpush1.msra.mxu0 0.0
      %615 = vmatprep.subr.mxu0 0.0
      %616 = vmatpush1.msra.mxu0 0.0
      %617 = vmatprep.mubr.f32.mxu0 0.0
      %618 = vmatmul.mubr.f32.gmra.mrb[0].mxu0 %v530
      %v619 = vpop.f32.mrb[0].mxu0
      %v620 = vadd.f32 0.0, %v619
      %v621 = vpop.f32.mrb[0].mxu0
      %622 = vmatprep.mubr.f32.mxu0 0.0
      %623 = vmatmul.mubr.f32.gmra.mrb[0].mxu0 %v533
      %v624 = vpop.f32.mrb[0].mxu0
      %v625 = vadd.f32 0.0, %v624
      %v626 = vpop.f32.mrb[0].mxu0
      %627 = vmatprep.mubr.f32.mxu0 0.0
      %628 = vmatmul.mubr.f32.gmra.mrb[0].mxu0 %v536
      %v629 = vpop.f32.mrb[0].mxu0
      %v630 = vadd.f32 0.0, %v629
      %v631 = vpop.f32.mrb[0].mxu0
      %632 = vmatprep.mubr.f32.mxu0 0.0
      %633 = vmatmul.mubr.f32.gmra.mrb[0].mxu0 %v539
      %v634 = vpop.f32.mrb[0].mxu0
      %v635 = vadd.f32 0.0, %v634
      %v636 = vpop.f32.mrb[0].mxu0
      %637 = vmatprep.mubr.f32.mxu0 0.0
      %638 = vmatmul.mubr.f32.gmra.mrb[0].mxu0 %v542
      %v639 = vpop.f32.mrb[0].mxu0
      %v640 = vadd.f32 0.0, %v639
      %v641 = vpop.f32.mrb[0].mxu0
      %642 = vmatprep.mubr.f32.mxu0 0.0
      %643 = vmatmul.mubr.f32.gmra.mrb[0].mxu0 %v545
      %v644 = vpop.f32.mrb[0].mxu0
      %v645 = vadd.f32 0.0, %v644
      %v646 = vpop.f32.mrb[0].mxu0
      %647 = vmatprep.mubr.f32.mxu0 0.0
      %648 = vmatmul.mubr.f32.gmra.mrb[0].mxu0 %v548
      %v649 = vpop.f32.mrb[0].mxu0
      %v650 = vadd.f32 0.0, %v649
      %v651 = vpop.f32.mrb[0].mxu0
      %652 = vmatprep.mubr.f32.mxu0 0.0
      %653 = vmatmul.mubr.f32.gmra.mrb[0].mxu0 %v551
      %v654 = vpop.f32.mrb[0].mxu0
      %v655 = vadd.f32 0.0, %v654
      %v656 = vpop.f32.mrb[0].mxu0
      %657 = vdwg.mxu0
      %v658 = vadd.f32 %v477, %v620
      %v659 = vadd.f32 %v482, %v625
      %v660 = vadd.f32 %v487, %v630
      %v661 = vadd.f32 %v492, %v635
      %v662 = vadd.f32 %v497, %v640
      %v663 = vadd.f32 %v502, %v645
      %v664 = vadd.f32 %v507, %v650
      %v665 = vadd.f32 %v512, %v655
      %v666 = vld [vmem:[%s517 + $0x1] sm:$0xff]
      %v667 = vld [vmem:[%s517 + $0x11] sm:$0xff]
      %v668 = vld [vmem:[%s517 + $0x21] sm:$0xff]
      %v669 = vld [vmem:[%s517 + $0x31] sm:$0xff]
      %v670 = vld [vmem:[%s517 + $0x41] sm:$0xff]
      %v671 = vld [vmem:[%s517 + $0x51] sm:$0xff]
      %v672 = vld [vmem:[%s517 + $0x61] sm:$0xff]
      %v673 = vld [vmem:[%s517 + $0x71] sm:$0xff]
      %s674 = scalar_lea.vmem %s1, 48
      %v675 = vld [vmem:[%s674] sm:$0xff]
      %v676 = vld [vmem:[%s674 + $0x8] sm:$0xff]
      %v678 = vsel %vm256, %v666, 0
      %v681 = vsel %vm256, %v667, 0
      %v684 = vsel %vm256, %v668, 0
      %v687 = vsel %vm256, %v669, 0
      %v690 = vsel %vm256, %v670, 0
      %v693 = vsel %vm256, %v671, 0
      %v696 = vsel %vm256, %v672, 0
      %v699 = vsel %vm256, %v673, 0
      %701 = vmatprep.subr.mxu0 0.0
      %702 = vmatpush1.msra.mxu0 %v675
      %703 = vmatprep.subr.mxu0 0.0
      %704 = vmatpush1.msra.mxu0 %v676
      %705 = vmatprep.subr.mxu0 0.0
      %706 = vmatpush1.msra.mxu0 0.0
      %707 = vmatprep.subr.mxu0 0.0
      %708 = vmatpush1.msra.mxu0 0.0
      %709 = vmatprep.subr.mxu0 0.0
      %710 = vmatpush1.msra.mxu0 0.0
      %711 = vmatprep.subr.mxu0 0.0
      %712 = vmatpush1.msra.mxu0 0.0
      %713 = vmatprep.subr.mxu0 0.0
      %714 = vmatpush1.msra.mxu0 0.0
      %715 = vmatprep.subr.mxu0 0.0
      %716 = vmatpush1.msra.mxu0 0.0
      %717 = vmatprep.subr.mxu0 0.0
      %718 = vmatpush1.msra.mxu0 0.0
      %719 = vmatprep.subr.mxu0 0.0
      %720 = vmatpush1.msra.mxu0 0.0
      %721 = vmatprep.subr.mxu0 0.0
      %722 = vmatpush1.msra.mxu0 0.0
      %723 = vmatprep.subr.mxu0 0.0
      %724 = vmatpush1.msra.mxu0 0.0
      %725 = vmatprep.subr.mxu0 0.0
      %726 = vmatpush1.msra.mxu0 0.0
      %727 = vmatprep.subr.mxu0 0.0
      %728 = vmatpush1.msra.mxu0 0.0
      %729 = vmatprep.subr.mxu0 0.0
      %730 = vmatpush1.msra.mxu0 0.0
      %731 = vmatprep.subr.mxu0 0.0
      %732 = vmatpush1.msra.mxu0 0.0
      %733 = vmatprep.subr.mxu0 0.0
      %734 = vmatpush1.msra.mxu0 0.0
      %735 = vmatprep.subr.mxu0 0.0
      %736 = vmatpush1.msra.mxu0 0.0
      %737 = vmatprep.subr.mxu0 0.0
      %738 = vmatpush1.msra.mxu0 0.0
      %739 = vmatprep.subr.mxu0 0.0
      %740 = vmatpush1.msra.mxu0 0.0
      %741 = vmatprep.subr.mxu0 0.0
      %742 = vmatpush1.msra.mxu0 0.0
      %743 = vmatprep.subr.mxu0 0.0
      %744 = vmatpush1.msra.mxu0 0.0
      %745 = vmatprep.subr.mxu0 0.0
      %746 = vmatpush1.msra.mxu0 0.0
      %747 = vmatprep.subr.mxu0 0.0
      %748 = vmatpush1.msra.mxu0 0.0
      %749 = vmatprep.subr.mxu0 0.0
      %750 = vmatpush1.msra.mxu0 0.0
      %751 = vmatprep.subr.mxu0 0.0
      %752 = vmatpush1.msra.mxu0 0.0
      %753 = vmatprep.subr.mxu0 0.0
      %754 = vmatpush1.msra.mxu0 0.0
      %755 = vmatprep.subr.mxu0 0.0
      %756 = vmatpush1.msra.mxu0 0.0
      %757 = vmatprep.subr.mxu0 0.0
      %758 = vmatpush1.msra.mxu0 0.0
      %759 = vmatprep.subr.mxu0 0.0
      %760 = vmatpush1.msra.mxu0 0.0
      %761 = vmatprep.subr.mxu0 0.0
      %762 = vmatpush1.msra.mxu0 0.0
      %763 = vmatprep.subr.mxu0 0.0
      %764 = vmatpush1.msra.mxu0 0.0
      %765 = vmatprep.mubr.f32.mxu0 0.0
      %766 = vmatmul.mubr.f32.gmra.mrb[0].mxu0 %v678
      %v767 = vpop.f32.mrb[0].mxu0
      %v768 = vadd.f32 0.0, %v767
      %v769 = vpop.f32.mrb[0].mxu0
      %770 = vmatprep.mubr.f32.mxu0 0.0
      %771 = vmatmul.mubr.f32.gmra.mrb[0].mxu0 %v681
      %v772 = vpop.f32.mrb[0].mxu0
      %v773 = vadd.f32 0.0, %v772
      %v774 = vpop.f32.mrb[0].mxu0
      %775 = vmatprep.mubr.f32.mxu0 0.0
      %776 = vmatmul.mubr.f32.gmra.mrb[0].mxu0 %v684
      %v777 = vpop.f32.mrb[0].mxu0
      %v778 = vadd.f32 0.0, %v777
      %v779 = vpop.f32.mrb[0].mxu0
      %780 = vmatprep.mubr.f32.mxu0 0.0
      %781 = vmatmul.mubr.f32.gmra.mrb[0].mxu0 %v687
      %v782 = vpop.f32.mrb[0].mxu0
      %v783 = vadd.f32 0.0, %v782
      %v784 = vpop.f32.mrb[0].mxu0
      %785 = vmatprep.mubr.f32.mxu0 0.0
      %786 = vmatmul.mubr.f32.gmra.mrb[0].mxu0 %v690
      %v787 = vpop.f32.mrb[0].mxu0
      %v788 = vadd.f32 0.0, %v787
      %v789 = vpop.f32.mrb[0].mxu0
      %790 = vmatprep.mubr.f32.mxu0 0.0
      %791 = vmatmul.mubr.f32.gmra.mrb[0].mxu0 %v693
      %v792 = vpop.f32.mrb[0].mxu0
      %v793 = vadd.f32 0.0, %v792
      %v794 = vpop.f32.mrb[0].mxu0
      %795 = vmatprep.mubr.f32.mxu0 0.0
      %796 = vmatmul.mubr.f32.gmra.mrb[0].mxu0 %v696
      %v797 = vpop.f32.mrb[0].mxu0
      %v798 = vadd.f32 0.0, %v797
      %v799 = vpop.f32.mrb[0].mxu0
      %800 = vmatprep.mubr.f32.mxu0 0.0
      %801 = vmatmul.mubr.f32.gmra.mrb[0].mxu0 %v699
      %v802 = vpop.f32.mrb[0].mxu0
      %v803 = vadd.f32 0.0, %v802
      %v804 = vpop.f32.mrb[0].mxu0
      %805 = vdwg.mxu0
      %v806 = vadd.f32 %v658, %v768
      %v807 = vadd.f32 %v659, %v773
      %v808 = vadd.f32 %v660, %v778
      %v809 = vadd.f32 %v661, %v783
      %v810 = vadd.f32 %v662, %v788
      %v811 = vadd.f32 %v663, %v793
      %v812 = vadd.f32 %v664, %v798
      %v813 = vadd.f32 %v665, %v803
      %v814 = vld [vmem:[%s2] sm:$0x1]
      %v816 = vlaneseq
      %v817 = vshrl.u32 %v816, 7
      %v818 = vsub.s32 0, %v817
      %v819 = vrot.slane %v814, %v818
      %v821 = vadd.f32 %v806, %v819
      %v822 = vadd.f32 %v807, %v819
      %v823 = vadd.f32 %v808, %v819
      %v824 = vadd.f32 %v809, %v819
      %v825 = vadd.f32 %v810, %v819
      %v826 = vadd.f32 %v811, %v819
      %v827 = vadd.f32 %v812, %v819
      %v828 = vadd.f32 %v813, %v819
      %829 = vst [vmem:[%s223] sm:$0xff] %v821
      %830 = vst [vmem:[%s223 + $0x8] sm:$0xff] %v822
      %831 = vst [vmem:[%s223 + $0x10] sm:$0xff] %v823
      %832 = vst [vmem:[%s223 + $0x18] sm:$0xff] %v824
      %833 = vst [vmem:[%s223 + $0x20] sm:$0xff] %v825
      %834 = vst [vmem:[%s223 + $0x28] sm:$0xff] %v826
      %835 = vst [vmem:[%s223 + $0x30] sm:$0xff] %v827
      %836 = vst [vmem:[%s223 + $0x38] sm:$0xff] %v828
      %v837 = vadd.f32 %v821, %v822
      %v838 = vadd.f32 %v837, %v823
      %v839 = vadd.f32 %v838, %v824
      %v840 = vadd.f32 %v839, %v825
      %v841 = vadd.f32 %v840, %v826
      %v842 = vadd.f32 %v841, %v827
      %v843 = vadd.f32 %v842, %v828
      %v844 = vrot.slane %v843, 4
      %v845 = vadd.f32 %v843, %v844
      %v846 = vrot.slane %v845, 2
      %v847 = vadd.f32 %v845, %v846
      %v848 = vrot.slane %v847, 1
      %v849 = vadd.f32 %v847, %v848
      %v850 = vmul.f32 %v821, %v821
      %v851 = vmul.f32 %v822, %v822
      %v852 = vmul.f32 %v823, %v823
      %v853 = vmul.f32 %v824, %v824
      %v854 = vmul.f32 %v825, %v825
      %v855 = vmul.f32 %v826, %v826
      %v856 = vmul.f32 %v827, %v827
      %v857 = vmul.f32 %v828, %v828
      %v858 = vadd.f32 %v850, %v851
      %v859 = vadd.f32 %v858, %v852
      %v860 = vadd.f32 %v859, %v853
      %v861 = vadd.f32 %v860, %v854
      %v862 = vadd.f32 %v861, %v855
      %v863 = vadd.f32 %v862, %v856
      %v864 = vadd.f32 %v863, %v857
      %v865 = vrot.slane %v864, 4
      %v866 = vadd.f32 %v864, %v865
      %v867 = vrot.slane %v866, 2
      %v868 = vadd.f32 %v866, %v867
      %v869 = vrot.slane %v868, 1
      %v870 = vadd.f32 %v868, %v869
      %vm871 = vcmask 1040384
      %v872 = vsel %vm871, %v849, %v870
      %873 = vst [vmem:[%s230] sm:$0x3] %v872
      %s874 = sadd.s32 %s20, %s21
      %s875 = smul.u32 8, %s874
      %p876 = scmp.lt.s32.totalorder %s875, 15
      %s877 = scalar_select %p876, %s875, 15
      %s878 = smul.addr %s877, 8
      %s879 = scalar_lea.vmem %s3, %s878
      %s880 = sadd.s32 %s20, %s21
      %p881 = scmp.lt.s32.totalorder %s880, 1
      %s882 = scalar_select %p881, %s880, 1
      %s883 = smul.addr %s882, 2
      %s884 = scalar_lea.vmem %s4, %s883
      // Predicated region
      $region33: #{down_forward.2} parent=31 // pred_check
        %p885 = pneg %p116
      $region34: #{down_forward.2} parent=31 // pred_check_branch
        %887 = sbr.rel (%p885) target = $region36
      $region35: #{down_forward.2} parent=31 // pred_region
        %s888 = sadd.s32 %s20, %s21
        %s889 = smul.u32 8, %s888
      $region36: #{down_forward.2} parent=31 // pred_fallthru
        _
      // Predicated region
      $region37: #{down_forward.2} parent=31 // pred_check
        %p890 = pneg %p144
      $region38: #{down_forward.2} parent=31 // pred_check_branch
        %892 = sbr.rel (%p890) target = $region40
      $region39: #{down_forward.2} parent=31 // pred_region
        %s893 = sadd.s32 %s20, %s21
      $region40: #{down_forward.2} parent=31 // pred_fallthru
        _
    $region32: #{down_forward.2} parent=5 // pred_fallthru
      _
    %p894 = scmp.le.s32.totalorder 2, %s11
    // Predicated region
    $region41: #{down_forward.2} parent=5 // pred_check
      %p895 = pneg %p894
    $region42: #{down_forward.2} parent=5 // pred_check_branch
      %897 = sbr.rel (%p895) target = $region44
    $region43: #{down_forward.2} parent=5 // pred_region
      %s898 = ssub.s32 %s11, 2
      // Predicated region
      $region45: #{down_forward.2} parent=43 // pred_check
        %p899 = pneg %p122
      $region46: #{down_forward.2} parent=43 // pred_check_branch
        %901 = sbr.rel (%p899) target = $region48
      $region47: #{down_forward.2} parent=43 // pred_region
        %s902 = sadd.s32 %s22, %s23
        %s903 = smul.u32 8, %s902
        %p904 = scmp.lt.s32.totalorder %s903, 15
        %s905 = scalar_select %p904, %s903, 15
        %s906 = smul.addr %s905, 8
        %s907 = scalar_lea.vmem %s3, %s906
      $region48: #{down_forward.2} parent=43 // pred_fallthru
        _
      // Predicated region
      $region49: #{down_forward.2} parent=43 // pred_check
        %p908 = pneg %p150
      $region50: #{down_forward.2} parent=43 // pred_check_branch
        %910 = sbr.rel (%p908) target = $region52
      $region51: #{down_forward.2} parent=43 // pred_region
        %s911 = sadd.s32 %s22, %s23
        %p912 = scmp.lt.s32.totalorder %s911, 1
        %s913 = scalar_select %p912, %s911, 1
        %s914 = smul.addr %s913, 2
        %s915 = scalar_lea.vmem %s4, %s914
      $region52: #{down_forward.2} parent=43 // pred_fallthru
        _
    $region44: #{down_forward.2} parent=5 // pred_fallthru
      _
  $region6: #{down_forward.2} parent=0 // loop_footer
    %s15 = sadd.s32 1, %s11
  $region7: #{down_forward.2} parent=0 // loop_footer_branch
    %10 = sbr.rel target = $region3
  $region8: #{down_forward.2} parent=0 // loop_exit
    _

</llo_original>
